<compile_context>
chip_gen: v7x
topology: tpu7x:2x2x1
jax: 0.10.0
libtpu: 0.0.40
codegen_flags: <defaults>
</compile_context>

<pallas_src>
import jax
import jax.numpy as jnp
from jax.experimental import pallas as pl
from jax.experimental.pallas import tpu as pltpu


# ----------------------------- Pallas kernel -----------------------------

def _custom_layernorm_kernel(x_ref, w_ref, o_ref):
    # x_ref: (C, TL)  channels on sublanes, flattened-spatial tile on lanes
    # w_ref: (C, 1)   per-channel grouped-1x1-conv weight (resident)
    x = x_ref[...].astype(jnp.float32)
    C = x.shape[0]
    mean = jnp.mean(x, axis=0, keepdims=True)                        # cross-sublane reduce (XLU)
    d = x - mean
    var = jnp.sum(d * d, axis=0, keepdims=True) * (1.0 / (C - 1))    # correction=1 (unbiased)
    inv = jax.lax.rsqrt(var + 1e-5)                                  # EUP rsqrt, frees VPU slot
    # Two-pass variance kept for numerical robustness; op stays HBM-bound.
    o_ref[...] = ((x * inv) * w_ref[...].astype(jnp.float32)).astype(o_ref.dtype)


# ----------------------------- tiling / wrapper -----------------------------

def _pick_lane_tile(C, HW, B, itemsize,
                    target_block_bytes=2 << 20,   # ~2 MiB of input per block (near HBM roofline)
                    vmem_budget_bytes=8 << 20):   # double-buffered in+out cap (safe on v5e/v6e/v7x)
    if HW <= 128:
        return HW                                  # single full block (equals full dim -> allowed)
    c_pad = max(8, ((C + 7) // 8) * 8)             # sublane padding of the channel dim in VMEM
    max_by_vmem = max(128, vmem_budget_bytes // (4 * c_pad * itemsize))
    tile = min(target_block_bytes // max(1, C * itemsize), max_by_vmem)
    tile = max(128, (tile // 128) * 128)           # lane tile must be a multiple of 128
    tile = min(tile, (HW // 128) * 128)            # never exceed HW (ragged last block is fine)
    # Guarantee >= 2 grid steps overall so v7x's 2nd TensorCore is used and
    # the pipeline actually double-buffers.
    while B * (-(-HW // tile)) < 2 and tile > 128:
        tile = max(128, ((tile // 2) // 128) * 128)
    return tile


def custom_layer_norm(x, w):
    """CustomLayerNorm forward.

    x: (B, C, H, W), f32 or bf16
    w: (C,) per-channel weight of the grouped 1x1 conv (PyTorch weight (C,1,1,1))
    """
    B, C, H, W = x.shape
    assert C >= 2, "correction=1 variance requires at least 2 channels"
    HW = H * W

    xf = x.reshape(B, C, HW)                      # zero-copy view, no transposes / pads
    itemsize = jnp.dtype(x.dtype).itemsize
    tile = _pick_lane_tile(C, HW, B, itemsize)
    n_lane = -(-HW // tile)                       # ragged last block handled by Pallas padding

    yf = pl.pallas_call(
        _custom_layernorm_kernel,
        out_shape=jax.ShapeDtypeStruct((B, C, HW), x.dtype),
        grid=(B, n_lane),
        in_specs=[
            pl.BlockSpec((pl.Squeezed(), C, tile), lambda b, i: (b, 0, i)),
            pl.BlockSpec((C, 1), lambda b, i: (0, 0)),   # constant -> weight stays resident
        ],
        out_specs=pl.BlockSpec((pl.Squeezed(), C, tile), lambda b, i: (b, 0, i)),
        compiler_params=pltpu.CompilerParams(
            dimension_semantics=("parallel", "parallel")),
    )(xf, w.reshape(C, 1).astype(jnp.float32))

    return yf.reshape(B, C, H, W)


def custom_layer_norm_ref(x, w):
    # Pure-JAX reference matching the PyTorch module exactly.
    x = x.astype(jnp.float32)
    var = jnp.var(x, axis=1, keepdims=True, ddof=1)
    return (x / jnp.sqrt(var + 1e-5)) * w.reshape(1, -1, 1, 1).astype(jnp.float32)


# ----------------------------- main -----------------------------

if __name__ == "__main__":
    key = jax.random.PRNGKey(0)
    kx, kw = jax.random.split(key)

    B, C, H, W = 2, 4, 16, 16
    x = jax.random.normal(kx, (B, C, H, W), dtype=jnp.float32)
    w = jax.random.normal(kw, (C,), dtype=jnp.float32)   # grouped conv weight (C,1,1,1) -> (C,)

    fwd = jax.jit(custom_layer_norm)

    # f32 path
    out = jax.block_until_ready(fwd(x, w))
    ref = custom_layer_norm_ref(x, w)
    assert out.shape == (B, C, H, W), out.shape
    assert bool(jnp.all(jnp.isfinite(out)))
    err = float(jnp.max(jnp.abs(out - ref)))
    assert bool(jnp.allclose(out, ref, atol=1e-5, rtol=1e-5)), err

    # bf16 I/O path (f32 math inside the kernel)
    x_bf = x.astype(jnp.bfloat16)
    out_bf = jax.block_until_ready(fwd(x_bf, w))
    ref_bf = custom_layer_norm_ref(x_bf.astype(jnp.float32), w)
    assert out_bf.dtype == jnp.bfloat16
    err_bf = float(jnp.max(jnp.abs(out_bf.astype(jnp.float32) - ref_bf)))
    assert bool(jnp.allclose(out_bf.astype(jnp.float32), ref_bf, atol=5e-2, rtol=5e-2)), err_bf

    print("KERNEL_OK")
</pallas_src>

<mosaic_0001>
module attributes {stable_mosaic.version = 11 : i64} {
  func.func @_custom_layernorm_kernel(%arg0: i32, %arg1: i32, %arg2: memref<1x4x256xf32, #tpu.memory_space<vmem>>, %arg3: memref<4x1xf32, #tpu.memory_space<vmem>>, %arg4: memref<1x4x256xf32, #tpu.memory_space<vmem>>) attributes {dimension_semantics = [#tpu.dimension_semantics<parallel>, #tpu.dimension_semantics<parallel>], iteration_bounds = array<i64: 2, 1>, scalar_prefetch = 0 : i64, scratch_operands = 0 : i64, tpu.core_type = #tpu.core_type<tc>, window_params = [{transform_indices = @transform_0, window_bounds = array<i64: 1, 4, 256>}, {pipeline_mode = #tpu.pipeline_mode<synchronous>, transform_indices = @transform_1, window_bounds = array<i64: 4, 1>}, {transform_indices = @transform_2, window_bounds = array<i64: 1, 4, 256>}]} {
    %c0 = arith.constant 0 : index
    %c0_0 = arith.constant 0 : index
    %c0_1 = arith.constant 0 : index
    %0 = vector.load %arg2[%c0, %c0_0, %c0_1] : memref<1x4x256xf32, #tpu.memory_space<vmem>>, vector<1x4x256xf32>
    %1 = vector.shape_cast %0 : vector<1x4x256xf32> to vector<4x256xf32>
    %cst = arith.constant dense<0.000000e+00> : vector<256xf32>
    %2 = vector.multi_reduction <add>, %1, %cst [0] : vector<4x256xf32> to vector<256xf32>
    %3 = vector.shape_cast %2 : vector<256xf32> to vector<1x256xf32>
    %cst_2 = arith.constant 4.000000e+00 : f32
    %4 = vector.broadcast %cst_2 : f32 to vector<1x256xf32>
    %5 = arith.divf %3, %4 : vector<1x256xf32>
    %6 = vector.broadcast %5 : vector<1x256xf32> to vector<4x256xf32>
    %7 = arith.subf %1, %6 : vector<4x256xf32>
    %8 = arith.mulf %7, %7 : vector<4x256xf32>
    %cst_3 = arith.constant dense<0.000000e+00> : vector<256xf32>
    %9 = vector.multi_reduction <add>, %8, %cst_3 [0] : vector<4x256xf32> to vector<256xf32>
    %10 = vector.shape_cast %9 : vector<256xf32> to vector<1x256xf32>
    %cst_4 = arith.constant 0.333333343 : f32
    %11 = vector.broadcast %cst_4 : f32 to vector<1x256xf32>
    %12 = arith.mulf %10, %11 : vector<1x256xf32>
    %cst_5 = arith.constant 9.99999974E-6 : f32
    %13 = vector.broadcast %cst_5 : f32 to vector<1x256xf32>
    %14 = arith.addf %12, %13 : vector<1x256xf32>
    %15 = math.rsqrt %14 : vector<1x256xf32>
    %16 = vector.broadcast %15 : vector<1x256xf32> to vector<4x256xf32>
    %17 = arith.mulf %1, %16 : vector<4x256xf32>
    %c0_6 = arith.constant 0 : index
    %c0_7 = arith.constant 0 : index
    %18 = vector.load %arg3[%c0_6, %c0_7] : memref<4x1xf32, #tpu.memory_space<vmem>>, vector<4x1xf32>
    %19 = vector.broadcast %18 : vector<4x1xf32> to vector<4x256xf32>
    %20 = arith.mulf %17, %19 : vector<4x256xf32>
    %c0_8 = arith.constant 0 : index
    %c0_9 = arith.constant 0 : index
    %c0_10 = arith.constant 0 : index
    %21 = vector.load %arg4[%c0_8, %c0_9, %c0_10] : memref<1x4x256xf32, #tpu.memory_space<vmem>>, vector<1x4x256xf32>
    %22 = vector.shape_cast %21 : vector<1x4x256xf32> to vector<4x256xf32>
    %23 = vector.shape_cast %20 : vector<4x256xf32> to vector<1x4x256xf32>
    tpu.vector_store %arg4[%c0_8, %c0_9, %c0_10], %23 {strides = array<i32>} : memref<1x4x256xf32, #tpu.memory_space<vmem>>, vector<1x4x256xf32>,
    return
  }
  func.func @transform_0(%arg0: i32, %arg1: i32) -> (i32, i32, i32) {
    %c0_i32 = arith.constant 0 : i32
    %c0_i32_0 = arith.constant 0 : i32
    return %arg0, %c0_i32, %arg1 : i32, i32, i32
  }
  func.func @transform_1(%arg0: i32, %arg1: i32) -> (i32, i32) {
    %c0_i32 = arith.constant 0 : i32
    %c0_i32_0 = arith.constant 0 : i32
    %c0_i32_1 = arith.constant 0 : i32
    return %c0_i32, %c0_i32_0 : i32, i32
  }
  func.func @transform_2(%arg0: i32, %arg1: i32) -> (i32, i32, i32) {
    %c0_i32 = arith.constant 0 : i32
    %c0_i32_0 = arith.constant 0 : i32
    return %arg0, %c0_i32, %arg1 : i32, i32, i32
  }
}

</mosaic_0001>

<llo_original>
// kernel: custom_layer_norm.1
$region0: #{custom_layer_norm.1}
  #allocation0 [shape = 'u32[]', space=smem, size = 0x4, offset = 0x4, fixed_abs, tag = 'smem constant byte address 0x4 - core index']
  #allocation1 [shape = 'u32[144,128]{1,0:T(1,128)}', space=vmem, size = 0x12000, scoped, tag = 'internal scratch']
  %s0 = inlined_call_operand.vmem [shape: f32[2,4,256], index: 0, kind: input, shape index: {}]
  %s1 = inlined_call_operand.vmem [shape: f32[4,1], index: 1, kind: input, shape index: {}]
  %s2 = inlined_call_operand.vmem [shape: f32[2,4,256], index: 2, kind: output, shape index: {}]
  %s3 = sld [smem:[#allocation0]]
  $region41: #{custom_layer_norm.1} parent=0
    _
  %s5 = ssub.s32 1, %s3
  %s6 = scalar_select 0, %s5, %s3
  loop: start=0, step=1, limit=4
  $region2: #{custom_layer_norm.1} parent=0 // loop_pre_header
    _
  $region3: #{custom_layer_norm.1} parent=0 // loop_header
    %s8 = sphi 0, %s12
    %p9 = scmp.ge.s32.totalorder %s8, 4
    %s15 = sphi 0, %s27
    %s16 = sphi 0, %s23
    %s17 = sphi 0, %s15
    %s18 = sphi 0, %s16
    %s19 = sphi 0, %s17
    %s20 = sphi 0, %s18
    %s32 = sphi 0, %s34
    %s35 = sphi 0, %s32
    %s36 = sphi 0, %s35
    %s52 = sphi 0, %s36
    %s56 = sphi 0, %s56
    %s58 = sphi 0, %s56
    %s59 = sphi 0, %s58
    %s73 = sphi 0, %s59
    %s81 = sphi 0, %s83
    %s84 = sphi 0, %s81
    %s85 = sphi 0, %s84
    %s101 = sphi 0, %s85
  $region4: #{custom_layer_norm.1} parent=0 // loop_header_branch
    %11 = sbr.rel (%p9) target = $region8
  $region5: #{custom_layer_norm.1} parent=0 // loop_body
    %s13 = ssub.s32 %s8, 1
    %s14 = ssub.s32 %s8, 2
    %s21 = sadd.s32 1, %s16
    %p22 = scmp.ge.s32.totalorder %s21, 1
    %s23 = scalar_select %p22, 0, %s21
    %s24 = sadd.s32 1, %s15
    %s25 = scalar_select %p22, %s24, %s15
    %p26 = scmp.ge.s32.totalorder %s25, 2
    %s27 = scalar_select %p26, 0, %s25
    %s28 = ssub.s32 %s15, %s27
    %s29 = ssub.s32 %s16, %s23
    %s30 = sor.u32 %s28, %s29
    %p31 = scmp.eq.s32.totalorder %s30, 0
    %s33 = sadd.s32 %s32, 1
    %s34 = scalar_select %p31, %s32, %s33
    %p37 = pneg %p31
    %p38 = scmp.eq.s32.totalorder %s8, 1
    %p39 = por %p37, %p38
    %p40 = scmp.ne.s32.totalorder %s32, %s35
    %p41 = scmp.eq.s32.totalorder %s8, 0
    %p42 = por %p40, %p41
    %p43 = scmp.ne.s32.totalorder %s32, %s35
    %p44 = scmp.eq.s32.totalorder %s13, 1
    %p45 = por %p43, %p44
    %p46 = scmp.ne.s32.totalorder %s35, %s36
    %p47 = scmp.eq.s32.totalorder %s13, 0
    %p48 = por %p46, %p47
    %p49 = scmp.ne.s32.totalorder %s35, %s36
    %p50 = scmp.eq.s32.totalorder %s14, 1
    %p51 = por %p49, %p50
    %p53 = scmp.ne.s32.totalorder %s36, %s52
    %p54 = scmp.eq.s32.totalorder %s14, 0
    %p55 = por %p53, %p54
    %s57 = sadd.s32 %s56, 1
    %p60 = scmp.eq.s32.totalorder %s8, 1
    %p61 = scmp.ne.s32.totalorder %s56, %s58
    %p62 = scmp.eq.s32.totalorder %s8, 0
    %p63 = por %p61, %p62
    %p64 = scmp.ne.s32.totalorder %s56, %s58
    %p65 = scmp.eq.s32.totalorder %s13, 1
    %p66 = por %p64, %p65
    %p67 = scmp.ne.s32.totalorder %s58, %s59
    %p68 = scmp.eq.s32.totalorder %s13, 0
    %p69 = por %p67, %p68
    %p70 = scmp.ne.s32.totalorder %s58, %s59
    %p71 = scmp.eq.s32.totalorder %s14, 1
    %p72 = por %p70, %p71
    %p74 = scmp.ne.s32.totalorder %s59, %s73
    %p75 = scmp.eq.s32.totalorder %s14, 0
    %p76 = por %p74, %p75
    %s77 = ssub.s32 %s15, %s27
    %s78 = ssub.s32 %s16, %s23
    %s79 = sor.u32 %s77, %s78
    %p80 = scmp.eq.s32.totalorder %s79, 0
    %s82 = sadd.s32 %s81, 1
    %s83 = scalar_select %p80, %s81, %s82
    %p86 = pneg %p80
    %p87 = scmp.eq.s32.totalorder %s8, 1
    %p88 = por %p86, %p87
    %p89 = scmp.ne.s32.totalorder %s81, %s84
    %p90 = scmp.eq.s32.totalorder %s8, 0
    %p91 = por %p89, %p90
    %p92 = scmp.ne.s32.totalorder %s81, %s84
    %p93 = scmp.eq.s32.totalorder %s13, 1
    %p94 = por %p92, %p93
    %p95 = scmp.ne.s32.totalorder %s84, %s85
    %p96 = scmp.eq.s32.totalorder %s13, 0
    %p97 = por %p95, %p96
    %p98 = scmp.ne.s32.totalorder %s84, %s85
    %p99 = scmp.eq.s32.totalorder %s14, 1
    %p100 = por %p98, %p99
    %p102 = scmp.ne.s32.totalorder %s85, %s101
    %p103 = scmp.eq.s32.totalorder %s14, 0
    %p104 = por %p102, %p103
    %p105 = scmp.le.s32.totalorder 1, %s8
    %p106 = scmp.lt.s32.totalorder %s8, 3
    %p107 = pnand %p105, %p106
    %p108 = pneg %p107
    // Predicated region
    $region9: #{custom_layer_norm.1} parent=5 // pred_check
      _
    $region10: #{custom_layer_norm.1} parent=5 // pred_check_branch
      %110 = sbr.rel (%p107) target = $region12
    $region11: #{custom_layer_norm.1} parent=5 // pred_region
      %s111 = ssub.s32 %s8, 1
      // Predicated region
      $region13: #{custom_layer_norm.1} parent=11 // pred_check
        %p112 = pneg %p69
      $region14: #{custom_layer_norm.1} parent=11 // pred_check_branch
        %114 = sbr.rel (%p112) target = $region16
      $region15: #{custom_layer_norm.1} parent=11 // pred_region
        _
      $region16: #{custom_layer_norm.1} parent=11 // pred_fallthru
        _
    $region12: #{custom_layer_norm.1} parent=5 // pred_fallthru
      _
    %p115 = scmp.lt.s32.totalorder %s8, 2
    // Predicated region
    $region17: #{custom_layer_norm.1} parent=5 // pred_check
      %p116 = pneg %p115
    $region18: #{custom_layer_norm.1} parent=5 // pred_check_branch
      %118 = sbr.rel (%p116) target = $region20
    $region19: #{custom_layer_norm.1} parent=5 // pred_region
      // Predicated region
      $region21: #{custom_layer_norm.1} parent=19 // pred_check
        %p119 = pneg %p42
      $region22: #{custom_layer_norm.1} parent=19 // pred_check_branch
        %121 = sbr.rel (%p119) target = $region24
      $region23: #{custom_layer_norm.1} parent=19 // pred_region
        %s122 = smul.u32 2, %s16
        %p123 = scmp.lt.s32.totalorder %s15, 1
        %s124 = scalar_select %p123, %s15, 1
        %p125 = scmp.lt.s32.totalorder %s122, 1
        %s126 = scalar_select %p125, %s122, 1
        %s127 = smul.addr %s124, 2
        %s128 = sadd.s32 %s126, %s127
        %s129 = smul.addr %s128, 4
        %s130 = scalar_lea.vmem %s0, %s129
        %s131 = smul.u32 2, %s16
      $region24: #{custom_layer_norm.1} parent=19 // pred_fallthru
        _
    $region20: #{custom_layer_norm.1} parent=5 // pred_fallthru
      _
    %p132 = scmp.le.s32.totalorder 1, %s8
    %p133 = scmp.lt.s32.totalorder %s8, 3
    %p134 = pnand %p132, %p133
    %p135 = pneg %p134
    // Predicated region
    $region25: #{custom_layer_norm.1} parent=5 // pred_check
      _
    $region26: #{custom_layer_norm.1} parent=5 // pred_check_branch
      %137 = sbr.rel (%p134) target = $region28
    $region27: #{custom_layer_norm.1} parent=5 // pred_region
      %s138 = ssub.s32 %s8, 1
      %s139 = smul.u32 2, %s18
      %p140 = scmp.lt.s32.totalorder %s17, 1
      %s141 = scalar_select %p140, %s17, 1
      %p142 = scmp.lt.s32.totalorder %s139, 1
      %s143 = scalar_select %p142, %s139, 1
      %s144 = smul.addr %s141, 2
      %s145 = sadd.s32 %s143, %s144
      %s146 = smul.addr %s145, 4
      %s147 = scalar_lea.vmem %s0, %s146
      %p148 = pneg %p48
      %p149 = pneg %p45
      %p150 = pneg %p69
      %p151 = pneg %p66
      %p152 = pneg %p97
      %p153 = pneg %p94
      %s154 = smul.u32 2, %s18
      %p155 = scmp.lt.s32.totalorder %s17, 1
      %s156 = scalar_select %p155, %s17, 1
      %p157 = scmp.lt.s32.totalorder %s154, 1
      %s158 = scalar_select %p157, %s154, 1
      %s159 = smul.addr %s156, 2
      %s160 = sadd.s32 %s158, %s159
      %s161 = smul.addr %s160, 4
      %s162 = scalar_lea.vmem %s2, %s161
      %s163 = smul.u32 2, %s18
      %p164 = scmp.lt.s32.totalorder %s17, 1
      %s165 = scalar_select %p164, %s17, 1
      %p166 = scmp.lt.s32.totalorder %s163, 1
      %s167 = scalar_select %p166, %s163, 1
      %s168 = smul.addr %s165, 2
      %s169 = sadd.s32 %s167, %s168
      %s170 = smul.addr %s169, 4
      %s171 = scalar_lea.vmem %s0, %s170
      %s172 = smul.u32 2, %s18
      %s173 = smul.u32 2, %s18
      %p174 = scmp.lt.s32.totalorder %s17, 1
      %s175 = scalar_select %p174, %s17, 1
      %p176 = scmp.lt.s32.totalorder %s173, 1
      %s177 = scalar_select %p176, %s173, 1
      %s178 = smul.addr %s175, 2
      %s179 = sadd.s32 %s177, %s178
      %s180 = smul.addr %s179, 4
      %s181 = scalar_lea.vmem %s2, %s180
      %s182 = smul.u32 2, %s18
      %v183 = vld [vmem:[%s171] sm:$0xff]
      %v185 = vcombine.high %v183, %v183
      %vm187 = vcmask 1043456
      %v188 = vsel %vm187, %v183, 0.0
      %v189 = vrot.slane %v188, 4
      %v190 = vadd.f32 %v188, %v189
      %v191 = vrot.slane %v190, 2
      %v192 = vadd.f32 %v190, %v191
      %v193 = vrot.slane %v192, 1
      %v194 = vadd.f32 %v192, %v193
      %v195 = vsel %vm187, %v185, 0.0
      %v196 = vrot.slane %v195, 4
      %v197 = vadd.f32 %v195, %v196
      %v198 = vrot.slane %v197, 2
      %v199 = vadd.f32 %v197, %v198
      %v200 = vrot.slane %v199, 1
      %v201 = vadd.f32 %v199, %v200
      %v202 = vrcp.pop 4.0
      %v203 = vmul.f32 %v194, %v202
      %v204 = vmul.f32 %v201, %v202
      %v207 = vcombine.low %v203, %v204
      %v209 = vsub.f32 %v183, %v207
      %v210 = vmul.f32 %v209, %v209
      %v212 = vcombine.high %v210, %v210
      %v214 = vsel %vm187, %v210, 0.0
      %v215 = vrot.slane %v214, 4
      %v216 = vadd.f32 %v214, %v215
      %v217 = vrot.slane %v216, 2
      %v218 = vadd.f32 %v216, %v217
      %v219 = vrot.slane %v218, 1
      %v220 = vadd.f32 %v218, %v219
      %v221 = vsel %vm187, %v212, 0.0
      %v222 = vrot.slane %v221, 4
      %v223 = vadd.f32 %v221, %v222
      %v224 = vrot.slane %v223, 2
      %v225 = vadd.f32 %v223, %v224
      %v226 = vrot.slane %v225, 1
      %v227 = vadd.f32 %v225, %v226
      %v228 = vmul.f32 %v220, 0.33333334
      %v229 = vmul.f32 %v227, 0.33333334
      %v230 = vadd.f32 %v228, 1e-05
      %v231 = vadd.f32 %v229, 1e-05
      %v232 = vrsqrt.pop %v230
      %v233 = vrsqrt.pop %v231
      %v236 = vcombine.low %v232, %v233
      %v238 = vmul.f32 %v183, %v236
      %v239 = vld [vmem:[%s1] sm:$0xf]
      %241 = vset.pattern.permute.xlu0 0
      %242 = vperm.xlu0 %241, %v239
      %v243 = vpop.permute.xlu0 %242
      %v245 = vunpack.c.l.s4 839922192
      %v246 = vunpack.c.0.s8 %v245
      %v247 = vlaneseq
      %v248 = vshrl.u32 %v247, 7
      %v249 = vsub.s32 %v246, %v248
      %v250 = vrot.slane %v243, %v249
      %v252 = vmul.f32 %v238, %v250
      %253 = vst [vmem:[%s181] sm:$0xff] %v252
      %s254 = smul.u32 2, %s18
      %p255 = scmp.lt.s32.totalorder %s17, 1
      %s256 = scalar_select %p255, %s17, 1
      %p257 = scmp.lt.s32.totalorder %s254, 1
      %s258 = scalar_select %p257, %s254, 1
      %s259 = smul.addr %s256, 2
      %s260 = sadd.s32 %s258, %s259
      %s261 = smul.addr %s260, 4
      %s262 = scalar_lea.vmem %s2, %s261
      // Predicated region
      $region29: #{custom_layer_norm.1} parent=27 // pred_check
        %p263 = pneg %p94
      $region30: #{custom_layer_norm.1} parent=27 // pred_check_branch
        %265 = sbr.rel (%p263) target = $region32
      $region31: #{custom_layer_norm.1} parent=27 // pred_region
        %s266 = smul.u32 2, %s18
      $region32: #{custom_layer_norm.1} parent=27 // pred_fallthru
        _
    $region28: #{custom_layer_norm.1} parent=5 // pred_fallthru
      _
    %p267 = scmp.le.s32.totalorder 2, %s8
    // Predicated region
    $region33: #{custom_layer_norm.1} parent=5 // pred_check
      %p268 = pneg %p267
    $region34: #{custom_layer_norm.1} parent=5 // pred_check_branch
      %270 = sbr.rel (%p268) target = $region36
    $region35: #{custom_layer_norm.1} parent=5 // pred_region
      %s271 = ssub.s32 %s8, 2
      // Predicated region
      $region37: #{custom_layer_norm.1} parent=35 // pred_check
        %p272 = pneg %p100
      $region38: #{custom_layer_norm.1} parent=35 // pred_check_branch
        %274 = sbr.rel (%p272) target = $region40
      $region39: #{custom_layer_norm.1} parent=35 // pred_region
        %s275 = smul.u32 2, %s20
        %p276 = scmp.lt.s32.totalorder %s19, 1
        %s277 = scalar_select %p276, %s19, 1
        %p278 = scmp.lt.s32.totalorder %s275, 1
        %s279 = scalar_select %p278, %s275, 1
        %s280 = smul.addr %s277, 2
        %s281 = sadd.s32 %s279, %s280
        %s282 = smul.addr %s281, 4
        %s283 = scalar_lea.vmem %s2, %s282
      $region40: #{custom_layer_norm.1} parent=35 // pred_fallthru
        _
    $region36: #{custom_layer_norm.1} parent=5 // pred_fallthru
      _
  $region6: #{custom_layer_norm.1} parent=0 // loop_footer
    %s12 = sadd.s32 1, %s8
  $region7: #{custom_layer_norm.1} parent=0 // loop_footer_branch
    %7 = sbr.rel target = $region3
  $region8: #{custom_layer_norm.1} parent=0 // loop_exit
    _

</llo_original>
